<compile_context>
chip_gen: v7x
topology: tpu7x:2x2x1
jax: 0.10.0
libtpu: 0.0.40
codegen_flags: <defaults>
</compile_context>

<pallas_src>
import jax
import jax.numpy as jnp
from jax.experimental import pallas as pl
from jax.experimental.pallas import tpu as pltpu


_LANE_CAP = 8192                    # max lane width per block (elements)
_TARGET_BLOCK_ELEMS = 512 * 1024    # ~2 MiB of f32 per block per buffer


def _denormalize_kernel(m_ref, s_ref, x_ref, o_ref):
    # m_ref / s_ref: (r_blk, 1) per-row channel constants; broadcast along lanes.
    # Hot path: one vadd + one vmul per vreg, full-width unmasked stores.
    o_ref[...] = (x_ref[...] + m_ref[...]) * s_ref[...]


def _choose_lane_width(L):
    """Largest multiple-of-128 divisor of L that is <= _LANE_CAP (else L itself,
    which is always a legal full-extent block dim)."""
    if L % 128 != 0:
        return L
    lb = 128
    d = 256
    cap = min(L, _LANE_CAP)
    while d <= cap:
        if L % d == 0:
            lb = d
        d += 128
    return lb


def denormalize(x, mean, std):
    """x: (N, 3, T, H, W); mean/std: (3,).  Returns (x + mean[c]) / std[c]."""
    N, C, T, H, W = x.shape
    assert C == mean.shape[0] == std.shape[0]

    L = T * H * W
    LB = _choose_lane_width(L)      # lane width (multiple of 128 when possible)
    R = L // LB                     # rows per (n, c) slab
    ROWS = N * C * R

    # Rows per block: respect the ~2 MiB per-buffer budget.  Align to 16 so the
    # sublane extent is legal for both f32 (8) and bf16 (16) packing; otherwise
    # take the full (always-legal) row extent when the whole array is small.
    max_rows = max(1, _TARGET_BLOCK_ELEMS // LB)
    if ROWS <= max_rows:
        r_blk = ROWS
    else:
        r_blk = max(16, (max_rows // 16) * 16)
    n_row_tiles = pl.cdiv(ROWS, r_blk)

    # Lane-dense 2-D view of x (contiguous reshape -> free).
    x2 = x.reshape(ROWS, LB)

    # Per-row channel constants; row order is (n, c, r) so channel is constant
    # within each row.  Precompute 1/std here (no in-kernel divide).
    mean_rows = jnp.broadcast_to(
        mean.astype(x.dtype)[None, :, None], (N, C, R)).reshape(ROWS, 1)
    inv_std_rows = jnp.broadcast_to(
        (1.0 / std).astype(x.dtype)[None, :, None], (N, C, R)).reshape(ROWS, 1)

    out2 = pl.pallas_call(
        _denormalize_kernel,
        out_shape=jax.ShapeDtypeStruct((ROWS, LB), x.dtype),
        grid_spec=pltpu.PrefetchScalarGridSpec(
            num_scalar_prefetch=0,
            grid=(n_row_tiles,),
            in_specs=[
                pl.BlockSpec((r_blk, 1), lambda i: (i, 0)),    # mean column
                pl.BlockSpec((r_blk, 1), lambda i: (i, 0)),    # 1/std column
                pl.BlockSpec((r_blk, LB), lambda i: (i, 0)),   # x tile
            ],
            out_specs=pl.BlockSpec((r_blk, LB), lambda i: (i, 0)),
        ),
        compiler_params=pltpu.CompilerParams(
            dimension_semantics=("parallel",),   # megacore-shardable on v7x
            vmem_limit_bytes=32 * 1024 * 1024,   # explicit headroom, all chips
        ),
    )(mean_rows, inv_std_rows, x2)

    return out2.reshape(N, C, T, H, W)


if __name__ == "__main__":
    # Deterministic "buffers" (the module __init__ takes arbitrary mean/std lists).
    mean = jnp.array([0.485, 0.456, 0.406], dtype=jnp.float32)
    std = jnp.array([0.229, 0.224, 0.225], dtype=jnp.float32)

    # Small 5-D input consistent with reshape(1, 3, 1, 1, 1): (N, C=3, T, H, W).
    key = jax.random.PRNGKey(0)
    x = jax.random.normal(key, (2, 3, 4, 16, 16), dtype=jnp.float32)

    out = jax.block_until_ready(denormalize(x, mean, std))

    # Pure-JAX reference check of the PyTorch forward semantics.
    ref = (x + mean.reshape(1, 3, 1, 1, 1)) / std.reshape(1, 3, 1, 1, 1)
    assert out.shape == x.shape and out.dtype == x.dtype
    assert jnp.allclose(out, ref, rtol=1e-5, atol=1e-5)

    print("KERNEL_OK")
</pallas_src>

<mosaic_0001>
module attributes {stable_mosaic.version = 11 : i64} {
  func.func @_denormalize_kernel(%arg0: i32, %arg1: memref<6x1xf32, #tpu.memory_space<vmem>>, %arg2: memref<6x1xf32, #tpu.memory_space<vmem>>, %arg3: memref<6x1024xf32, #tpu.memory_space<vmem>>, %arg4: memref<6x1024xf32, #tpu.memory_space<vmem>>) attributes {dimension_semantics = [#tpu.dimension_semantics<parallel>], iteration_bounds = array<i64: 1>, scalar_prefetch = 0 : i64, scratch_operands = 0 : i64, tpu.core_type = #tpu.core_type<tc>, window_params = [{transform_indices = @transform_0, window_bounds = array<i64: 6, 1>}, {transform_indices = @transform_1, window_bounds = array<i64: 6, 1>}, {transform_indices = @transform_2, window_bounds = array<i64: 6, 1024>}, {transform_indices = @transform_3, window_bounds = array<i64: 6, 1024>}]} {
    %c0 = arith.constant 0 : index
    %c0_0 = arith.constant 0 : index
    %0 = vector.load %arg3[%c0, %c0_0] : memref<6x1024xf32, #tpu.memory_space<vmem>>, vector<6x1024xf32>
    %c0_1 = arith.constant 0 : index
    %c0_2 = arith.constant 0 : index
    %1 = vector.load %arg1[%c0_1, %c0_2] : memref<6x1xf32, #tpu.memory_space<vmem>>, vector<6x1xf32>
    %2 = vector.broadcast %1 : vector<6x1xf32> to vector<6x1024xf32>
    %3 = arith.addf %0, %2 : vector<6x1024xf32>
    %c0_3 = arith.constant 0 : index
    %c0_4 = arith.constant 0 : index
    %4 = vector.load %arg2[%c0_3, %c0_4] : memref<6x1xf32, #tpu.memory_space<vmem>>, vector<6x1xf32>
    %5 = vector.broadcast %4 : vector<6x1xf32> to vector<6x1024xf32>
    %6 = arith.mulf %3, %5 : vector<6x1024xf32>
    %c0_5 = arith.constant 0 : index
    %c0_6 = arith.constant 0 : index
    %7 = vector.load %arg4[%c0_5, %c0_6] : memref<6x1024xf32, #tpu.memory_space<vmem>>, vector<6x1024xf32>
    tpu.vector_store %arg4[%c0_5, %c0_6], %6 {strides = array<i32>} : memref<6x1024xf32, #tpu.memory_space<vmem>>, vector<6x1024xf32>,
    return
  }
  func.func @transform_0(%arg0: i32) -> (i32, i32) {
    %c0_i32 = arith.constant 0 : i32
    %c0_i32_0 = arith.constant 0 : i32
    return %arg0, %c0_i32 : i32, i32
  }
  func.func @transform_1(%arg0: i32) -> (i32, i32) {
    %c0_i32 = arith.constant 0 : i32
    %c0_i32_0 = arith.constant 0 : i32
    return %arg0, %c0_i32 : i32, i32
  }
  func.func @transform_2(%arg0: i32) -> (i32, i32) {
    %c0_i32 = arith.constant 0 : i32
    %c0_i32_0 = arith.constant 0 : i32
    return %arg0, %c0_i32 : i32, i32
  }
  func.func @transform_3(%arg0: i32) -> (i32, i32) {
    %c0_i32 = arith.constant 0 : i32
    %c0_i32_0 = arith.constant 0 : i32
    return %arg0, %c0_i32 : i32, i32
  }
}

</mosaic_0001>

<llo_original>
// kernel: tpu_custom_call.1
$region0: #{tpu_custom_call.1}
  #allocation0 [shape = 'u32[]', space=smem, size = 0x4, offset = 0x4, fixed_abs, tag = 'smem constant byte address 0x4 - core index']
  #allocation1 [shape = 'u32[144,128]{1,0:T(1,128)}', space=vmem, size = 0x12000, scoped, tag = 'internal scratch']
  %s0 = inlined_call_operand.vmem [shape: f32[6,1], index: 0, kind: input, shape index: {}]
  %s1 = inlined_call_operand.vmem [shape: f32[6,1], index: 1, kind: input, shape index: {}]
  %s2 = inlined_call_operand.hbm [shape: f32[6,1024], index: 2, kind: input, shape index: {}]
  %s3 = inlined_call_operand.hbm [shape: f32[6,1024], index: 3, kind: output, shape index: {}]
  %s4 = sld [smem:[#allocation0]]
  $region26: #{tpu_custom_call.1} parent=0
    _
  %s6 = ssub.s32 1, %s4
  %s7 = scalar_select 0, %s6, %s4
  $region1: #{tpu_custom_call.1} parent=0
    #allocation2 [shape = 'u8[32768]{0}', space=vmem, size = 0x8000, scoped, tag = 'input window, operand 2, single buffered']
    #allocation3 [shape = 's32[1]{0}', space=sflag, size = 0x4, scoped, tag = 'scoped memory for tpu_custom_call.1']
    #allocation4 [shape = 's32[1]{0}', space=sflag, size = 0x4, scoped, tag = 'scoped memory for tpu_custom_call.1']
    #allocation5 [shape = 'u8[32768]{0}', space=vmem, size = 0x8000, scoped, tag = 'output window, operand 0, single buffered']
    %8 = vsyncpa [#allocation3], 0
    %9 = vsyncpa [#allocation4], 0
    // Predicated region
    $region2: #{tpu_custom_call.1} parent=1 // pred_check
      _
    $region3: #{tpu_custom_call.1} parent=1 // pred_check_branch
      %11 = sbr.rel (0) target = $region5
    $region4: #{tpu_custom_call.1} parent=1 // pred_region
      _
    $region5: #{tpu_custom_call.1} parent=1 // pred_fallthru
      _
    // Predicated region
    $region6: #{tpu_custom_call.1} parent=1 // pred_check
      _
    $region7: #{tpu_custom_call.1} parent=1 // pred_check_branch
      %13 = sbr.rel (0) target = $region9
    $region8: #{tpu_custom_call.1} parent=1 // pred_region
      _
    $region9: #{tpu_custom_call.1} parent=1 // pred_fallthru
      _
    // Predicated region
    $region10: #{tpu_custom_call.1} parent=1 // pred_check
      _
    $region11: #{tpu_custom_call.1} parent=1 // pred_check_branch
      %15 = sbr.rel (0) target = $region13
    $region12: #{tpu_custom_call.1} parent=1 // pred_region
      %s17 = ssub.s32 1024, 1024
      %18 = vsyncadd [#allocation3], %s17
      %s20 = sshll.u32 [#allocation2], 4
      %s21 = int_to_ptr.vmem [resolvable:$true] %s20
      %23 = dma.hbm_to_vmem [thread:$0]  %s2, 1024, %s21, [#allocation3]
    $region13: #{tpu_custom_call.1} parent=1 // pred_fallthru
      _
    // Predicated region
    $region14: #{tpu_custom_call.1} parent=1 // pred_check
      _
    $region15: #{tpu_custom_call.1} parent=1 // pred_check_branch
      %25 = sbr.rel (0) target = $region17
    $region16: #{tpu_custom_call.1} parent=1 // pred_region
      %26 = dma.done [#allocation3], 1024
    $region17: #{tpu_custom_call.1} parent=1 // pred_fallthru
      _
    %v27 = vld [vmem:[#allocation2] sm:$0x3f]
    %v28 = vld [vmem:[#allocation2 + $0x8] sm:$0x3f]
    %v29 = vld [vmem:[#allocation2 + $0x10] sm:$0x3f]
    %v30 = vld [vmem:[#allocation2 + $0x18] sm:$0x3f]
    %v31 = vld [vmem:[#allocation2 + $0x20] sm:$0x3f]
    %v32 = vld [vmem:[#allocation2 + $0x28] sm:$0x3f]
    %v33 = vld [vmem:[#allocation2 + $0x30] sm:$0x3f]
    %v34 = vld [vmem:[#allocation2 + $0x38] sm:$0x3f]
    %v35 = vld [vmem:[%s0] sm:$0x3f]
    %37 = vset.pattern.permute.xlu0 0
    %38 = vperm.xlu0 %37, %v35
    %v39 = vpop.permute.xlu0 %38
    %v41 = vadd.f32 %v27, %v39
    %v42 = vadd.f32 %v28, %v39
    %v43 = vadd.f32 %v29, %v39
    %v44 = vadd.f32 %v30, %v39
    %v45 = vadd.f32 %v31, %v39
    %v46 = vadd.f32 %v32, %v39
    %v47 = vadd.f32 %v33, %v39
    %v48 = vadd.f32 %v34, %v39
    %v49 = vld [vmem:[%s1] sm:$0x3f]
    %51 = vset.pattern.permute.xlu0 0
    %52 = vperm.xlu0 %51, %v49
    %v53 = vpop.permute.xlu0 %52
    %v55 = vmul.f32 %v41, %v53
    %v56 = vmul.f32 %v42, %v53
    %v57 = vmul.f32 %v43, %v53
    %v58 = vmul.f32 %v44, %v53
    %v59 = vmul.f32 %v45, %v53
    %v60 = vmul.f32 %v46, %v53
    %v61 = vmul.f32 %v47, %v53
    %v62 = vmul.f32 %v48, %v53
    %63 = vst [vmem:[#allocation5] sm:$0x3f] %v55
    %64 = vst [vmem:[#allocation5 + $0x8] sm:$0x3f] %v56
    %65 = vst [vmem:[#allocation5 + $0x10] sm:$0x3f] %v57
    %66 = vst [vmem:[#allocation5 + $0x18] sm:$0x3f] %v58
    %67 = vst [vmem:[#allocation5 + $0x20] sm:$0x3f] %v59
    %68 = vst [vmem:[#allocation5 + $0x28] sm:$0x3f] %v60
    %69 = vst [vmem:[#allocation5 + $0x30] sm:$0x3f] %v61
    %70 = vst [vmem:[#allocation5 + $0x38] sm:$0x3f] %v62
    // Predicated region
    $region18: #{tpu_custom_call.1} parent=1 // pred_check
      _
    $region19: #{tpu_custom_call.1} parent=1 // pred_check_branch
      %72 = sbr.rel (0) target = $region21
    $region20: #{tpu_custom_call.1} parent=1 // pred_region
      %s74 = ssub.s32 1024, 1024
      %75 = vsyncadd [#allocation4], %s74
      %s77 = sshll.u32 [#allocation5], 4
      %s78 = int_to_ptr.vmem [resolvable:$true] %s77
      %80 = dma.vmem_to_hbm [thread:$0]  %s78, 1024, %s3, [#allocation4]
    $region21: #{tpu_custom_call.1} parent=1 // pred_fallthru
      _
    // Predicated region
    $region22: #{tpu_custom_call.1} parent=1 // pred_check
      _
    $region23: #{tpu_custom_call.1} parent=1 // pred_check_branch
      %82 = sbr.rel (0) target = $region25
    $region24: #{tpu_custom_call.1} parent=1 // pred_region
      %83 = dma.done [#allocation4], 1024
    $region25: #{tpu_custom_call.1} parent=1 // pred_fallthru
      _
    %84 = vsyncpa [#allocation3], 1
    %85 = vsyncpa [#allocation4], 1

</llo_original>
